<compile_context>
chip_gen: v5e
topology: v5e:2x2
jax: 0.10.0
libtpu: 0.0.40
codegen_flags: <defaults>
</compile_context>

<pallas_src>
import functools

import jax
import jax.numpy as jnp
from jax.experimental import pallas as pl
from jax.experimental.pallas import tpu as pltpu

EPS = 1e-5
NEG_SLOPE = 0.2


# ----------------------------------------------------------------------------- kernels


def _fused_single_tile_kernel(x_ref, w_ref, o_ref, *, cout, count):
    # x_ref : (1, Cin, hw_pad)      spatial (H*W) on lanes
    # w_ref : (4*Cout, Cin)         row = (kh*2+kw)*Cout + co
    # o_ref : (1, 4*Cout, hw_pad)   same row layout, spatial on lanes
    y = jnp.dot(w_ref[...], x_ref[0], preferred_element_type=jnp.float32)  # (4*Cout, hw)

    s = jnp.sum(y, axis=1, keepdims=True)                                  # (4*Cout, 1)
    ss = jnp.sum(y * y, axis=1, keepdims=True)
    # Collapse the 4 taps (rows g*Cout + co) into per-out-channel totals.
    s_co = s[0:cout] + s[cout:2 * cout] + s[2 * cout:3 * cout] + s[3 * cout:4 * cout]
    ss_co = ss[0:cout] + ss[cout:2 * cout] + ss[2 * cout:3 * cout] + ss[3 * cout:4 * cout]
    mean = s_co * (1.0 / count)
    var = jnp.maximum(ss_co * (1.0 / count) - mean * mean, 0.0)
    inv = jax.lax.rsqrt(var + EPS)

    mean4 = jnp.tile(mean, (4, 1))
    inv4 = jnp.tile(inv, (4, 1))
    yn = (y - mean4) * inv4
    o_ref[0] = jnp.where(yn >= 0, yn, NEG_SLOPE * yn).astype(o_ref.dtype)


def _fused_two_phase_kernel(x_ref, w_ref, o_ref, xsum_acc, gram_acc, mean_sc, inv_sc, *,
                            cout, count):
    # x_ref : (1, Cin, thw)         input tile, spatial on lanes
    # w_ref : (4*Cout, Cin)
    # o_ref : (1, 4*Cout, thw)
    # xsum_acc : (Cin, 1)           running sum_hw(x)
    # gram_acc : (Cin, Cin)         running Gram  x @ x^T
    # mean_sc / inv_sc : (4*Cout, 1) finalized stats, tiled over the 4 taps
    p = pl.program_id(1)            # phase: 0 = x-moment accumulation, 1 = matmul+write
    t = pl.program_id(2)            # hw-tile index
    last_t = pl.num_programs(2) - 1

    @pl.when(jnp.logical_and(p == 0, t == 0))
    def _init():
        xsum_acc[...] = jnp.zeros_like(xsum_acc)
        gram_acc[...] = jnp.zeros_like(gram_acc)

    @pl.when(p == 0)
    def _accumulate_moments():
        xt = x_ref[0]
        xsum_acc[...] += jnp.sum(xt.astype(jnp.float32), axis=1, keepdims=True)
        gram_acc[...] += jax.lax.dot_general(
            xt, xt, (((1,), (1,)), ((), ())), preferred_element_type=jnp.float32)

    @pl.when(jnp.logical_and(p == 0, t == last_t))
    def _finalize_stats():
        w = w_ref[...].astype(jnp.float32)
        s = jnp.dot(w, xsum_acc[...], preferred_element_type=jnp.float32)     # (4*Cout, 1)
        wg = jnp.dot(w, gram_acc[...], preferred_element_type=jnp.float32)    # (4*Cout, Cin)
        ss = jnp.sum(wg * w, axis=1, keepdims=True)                           # (4*Cout, 1)
        s_co = s[0:cout] + s[cout:2 * cout] + s[2 * cout:3 * cout] + s[3 * cout:4 * cout]
        ss_co = ss[0:cout] + ss[cout:2 * cout] + ss[2 * cout:3 * cout] + ss[3 * cout:4 * cout]
        mean = s_co * (1.0 / count)
        # Clamp guards tiny negative values from E[y^2] - mean^2 cancellation.
        var = jnp.maximum(ss_co * (1.0 / count) - mean * mean, 0.0)
        inv = jax.lax.rsqrt(var + EPS)
        mean_sc[...] = jnp.tile(mean, (4, 1))
        inv_sc[...] = jnp.tile(inv, (4, 1))

    @pl.when(p == 1)
    def _matmul_normalize_write():
        y = jnp.dot(w_ref[...], x_ref[0], preferred_element_type=jnp.float32)
        yn = (y - mean_sc[...]) * inv_sc[...]
        o_ref[0] = jnp.where(yn >= 0, yn, NEG_SLOPE * yn).astype(o_ref.dtype)


# ----------------------------------------------------------------------------- wrapper


def _tpu_vmem_capacity_bytes():
    try:
        return int(pltpu.get_tpu_info().vmem_capacity_bytes)
    except Exception:
        return 128 * 1024 * 1024    # v5e/v6e-class default


def _derive_tiling(hw_pad, cin, cout, x_bytes):
    """Generation-aware VMEM limit and hw-tile size."""
    vmem_total = _tpu_vmem_capacity_bytes()
    small_vmem = vmem_total <= 64 * 1024 * 1024           # v7x-class: leave headroom
    vmem_limit = (48 if small_vmem else 64) * 1024 * 1024
    # Live bytes per lane of tile width: x (double-buffered) + f32 output block
    # (double-buffered) + f32 y/yn temporaries.
    per_lane = 2 * cin * x_bytes + (2 + 2) * 4 * cout * 4
    budget = vmem_limit // 2
    cap = 1024 if small_vmem else 2048
    max_thw = max(128, min(cap, (budget // per_lane) // 128 * 128))
    if hw_pad <= max_thw:
        return vmem_limit, hw_pad
    # Largest multiple-of-128 divisor of hw_pad that fits the budget.
    thw = 128
    t = 256
    while t <= max_thw:
        if hw_pad % t == 0:
            thw = t
        t += 128
    return vmem_limit, thw


def transpose_conv_block(x_nchw, weight, hw_tile=None, use_bf16_matmul=False):
    """x_nchw: (N, Cin, H, W) f32; weight: (Cin, Cout, 2, 2) f32 (PyTorch layout).

    Returns (N, Cout, 2H, 2W) f32, matching TransposeConvBlock.forward.
    """
    n, cin, h, w = x_nchw.shape
    cout = weight.shape[1]
    hw = h * w
    hw_pad = ((hw + 127) // 128) * 128     # lane-dense, unmasked stores

    cdt = jnp.bfloat16 if use_bf16_matmul else jnp.float32
    x_k = x_nchw.reshape(n, cin, hw).astype(cdt)
    if hw_pad != hw:
        x_k = jnp.pad(x_k, ((0, 0), (0, 0), (0, hw_pad - hw)))   # zero pad -> no stat bias
    # Weight rows ordered (kh, kw, co): row = (kh*2+kw)*Cout + co.
    w_k = jnp.transpose(weight, (2, 3, 1, 0)).reshape(4 * cout, cin).astype(cdt)

    x_bytes = 2 if use_bf16_matmul else 4
    vmem_limit, thw = _derive_tiling(hw_pad, cin, cout, x_bytes)
    if hw_tile is not None:
        thw = hw_tile
    assert hw_pad % thw == 0 and (thw == hw_pad or thw % 128 == 0), (hw_pad, thw)
    n_tiles = hw_pad // thw
    count = float(4 * hw)                  # true element count per (n, co) instance
    out_shape = jax.ShapeDtypeStruct((n, 4 * cout, hw_pad), jnp.float32)

    if n_tiles == 1:
        # Fast path: one grid step per image, matmul runs exactly once.
        o_k = pl.pallas_call(
            functools.partial(_fused_single_tile_kernel, cout=cout, count=count),
            out_shape=out_shape,
            grid=(n,),
            in_specs=[
                pl.BlockSpec((1, cin, hw_pad), lambda i: (i, 0, 0)),
                pl.BlockSpec((4 * cout, cin), lambda i: (0, 0)),
            ],
            out_specs=pl.BlockSpec((1, 4 * cout, hw_pad), lambda i: (i, 0, 0)),
            compiler_params=pltpu.CompilerParams(
                dimension_semantics=("parallel",),
                vmem_limit_bytes=vmem_limit,
            ),
        )(x_k, w_k)
    else:
        o_k = pl.pallas_call(
            functools.partial(_fused_two_phase_kernel, cout=cout, count=count),
            out_shape=out_shape,
            grid=(n, 2, n_tiles),
            in_specs=[
                pl.BlockSpec((1, cin, thw), lambda i, p, t: (i, 0, t)),
                pl.BlockSpec((4 * cout, cin), lambda i, p, t: (0, 0)),
            ],
            # Phase 0 parks the output window on tile 0 (never written, never flushed);
            # phase 1 streams the real tiles, each written exactly once.
            out_specs=pl.BlockSpec((1, 4 * cout, thw), lambda i, p, t: (i, 0, t * p)),
            scratch_shapes=[
                pltpu.VMEM((cin, 1), jnp.float32),        # running sum_hw(x)
                pltpu.VMEM((cin, cin), jnp.float32),      # running Gram x @ x^T
                pltpu.VMEM((4 * cout, 1), jnp.float32),   # mean (tiled x4 over taps)
                pltpu.VMEM((4 * cout, 1), jnp.float32),   # inv-std (tiled x4 over taps)
            ],
            compiler_params=pltpu.CompilerParams(
                dimension_semantics=("parallel", "arbitrary", "arbitrary"),
                vmem_limit_bytes=vmem_limit,
            ),
        )(x_k, w_k)

    # Epilogue: interleave the 4 taps back into NCHW.
    # TODO(synk): the kh/kw tap interleave stays in XLA (one fused slice+transpose);
    # Pallas TPU has no clean f32 lane-interleave primitive to emit (N,Cout,2H,2W) directly.
    if hw_pad != hw:
        o_k = o_k[:, :, :hw]
    o = o_k.reshape(n, 2, 2, cout, h, w)              # (n, kh, kw, co, h, w)
    o = jnp.transpose(o, (0, 3, 4, 1, 5, 2))          # (n, co, h, kh, w, kw)
    return o.reshape(n, cout, 2 * h, 2 * w)


# --------------------------------------------------------------------------- reference


def _reference(x_nchw, weight):
    """Pure-JAX reference mirroring the PyTorch module semantics."""
    n, cin, h, w = x_nchw.shape
    cout = weight.shape[1]
    y = jnp.einsum("nchw,cokl->nohkwl", x_nchw, weight)
    y = y.reshape(n, cout, 2 * h, 2 * w)
    mean = y.mean(axis=(2, 3), keepdims=True)
    var = ((y - mean) ** 2).mean(axis=(2, 3), keepdims=True)
    y = (y - mean) * jax.lax.rsqrt(var + EPS)
    return jnp.where(y >= 0, y, NEG_SLOPE * y)


if __name__ == "__main__":
    key = jax.random.PRNGKey(0)
    kx, kw_, kx2 = jax.random.split(key, 3)

    N, IN_CHANS, OUT_CHANS, H, W = 2, 4, 8, 16, 16

    x = jax.random.normal(kx, (N, IN_CHANS, H, W), dtype=jnp.float32)
    fan_in = IN_CHANS * 2 * 2
    bound = 1.0 / (fan_in ** 0.5)
    weight = jax.random.uniform(
        kw_, (IN_CHANS, OUT_CHANS, 2, 2), dtype=jnp.float32, minval=-bound, maxval=bound
    )

    ref = _reference(x, weight)

    # 1) Default tiling -> single-tile fast path at this size.
    out = jax.block_until_ready(transpose_conv_block(x, weight))
    assert out.shape == (N, OUT_CHANS, 2 * H, 2 * W), out.shape
    assert jnp.allclose(out, ref, atol=1e-4, rtol=1e-4), float(jnp.max(jnp.abs(out - ref)))

    # 2) Forced multi-tile path (exercises Gram-stat accumulation / two-phase pipeline).
    out_t = jax.block_until_ready(transpose_conv_block(x, weight, hw_tile=128))
    assert jnp.allclose(out_t, ref, atol=1e-4, rtol=1e-4), float(jnp.max(jnp.abs(out_t - ref)))

    # 3) Non-multiple-of-128 spatial size -> lane-padding path (single-tile and multi-tile).
    x_odd = jax.random.normal(kx2, (N, IN_CHANS, 12, 12), dtype=jnp.float32)
    ref_odd = _reference(x_odd, weight)
    out_odd = jax.block_until_ready(transpose_conv_block(x_odd, weight))
    assert out_odd.shape == (N, OUT_CHANS, 24, 24), out_odd.shape
    assert jnp.allclose(out_odd, ref_odd, atol=1e-4, rtol=1e-4), \
        float(jnp.max(jnp.abs(out_odd - ref_odd)))
    out_odd_t = jax.block_until_ready(transpose_conv_block(x_odd, weight, hw_tile=128))
    assert jnp.allclose(out_odd_t, ref_odd, atol=1e-4, rtol=1e-4), \
        float(jnp.max(jnp.abs(out_odd_t - ref_odd)))

    # 4) Optional bf16-matmul path (looser tolerance; stats/normalize stay f32).
    out_bf = jax.block_until_ready(transpose_conv_block(x, weight, use_bf16_matmul=True))
    assert jnp.allclose(out_bf, ref, atol=5e-2, rtol=5e-2), float(jnp.max(jnp.abs(out_bf - ref)))

    print("KERNEL_OK")
</pallas_src>

<mosaic_0001>
module attributes {stable_mosaic.version = 11 : i64} {
  func.func @_fused_single_tile_kernel(%arg0: i32, %arg1: memref<1x4x256xf32, #tpu.memory_space<vmem>>, %arg2: memref<32x4xf32, #tpu.memory_space<vmem>>, %arg3: memref<1x32x256xf32, #tpu.memory_space<vmem>>) attributes {dimension_semantics = [#tpu.dimension_semantics<parallel>], iteration_bounds = array<i64: 2>, scalar_prefetch = 0 : i64, scratch_operands = 0 : i64, tpu.core_type = #tpu.core_type<tc>, window_params = [{transform_indices = @transform_0, window_bounds = array<i64: 1, 4, 256>}, {pipeline_mode = #tpu.pipeline_mode<synchronous>, transform_indices = @transform_1, window_bounds = array<i64: 32, 4>}, {transform_indices = @transform_2, window_bounds = array<i64: 1, 32, 256>}]} {
    %c0 = arith.constant 0 : index
    %c0_0 = arith.constant 0 : index
    %0 = vector.load %arg2[%c0, %c0_0] : memref<32x4xf32, #tpu.memory_space<vmem>>, vector<32x4xf32>
    %c0_1 = arith.constant 0 : index
    %c0_2 = arith.constant 0 : index
    %c0_3 = arith.constant 0 : index
    %1 = vector.load %arg1[%c0_1, %c0_2, %c0_3] : memref<1x4x256xf32, #tpu.memory_space<vmem>>, vector<1x4x256xf32>
    %2 = vector.shape_cast %1 : vector<1x4x256xf32> to vector<4x256xf32>
    %cst = arith.constant dense<0.000000e+00> : vector<32x256xf32>
    %3 = tpu.matmul %0, %2, %cst {dimension_numbers = #tpu.dot_dimension_numbers<[1], [0], [0], [1], [0, 0, 1, 1], [], []>} : vector<32x4xf32>, vector<4x256xf32>, vector<32x256xf32> -> vector<32x256xf32>
    %cst_4 = arith.constant dense<0.000000e+00> : vector<32xf32>
    %4 = vector.multi_reduction <add>, %3, %cst_4 [1] : vector<32x256xf32> to vector<32xf32>
    %5 = vector.shape_cast %4 : vector<32xf32> to vector<32x1xf32>
    %6 = arith.mulf %3, %3 : vector<32x256xf32>
    %cst_5 = arith.constant dense<0.000000e+00> : vector<32xf32>
    %7 = vector.multi_reduction <add>, %6, %cst_5 [1] : vector<32x256xf32> to vector<32xf32>
    %8 = vector.shape_cast %7 : vector<32xf32> to vector<32x1xf32>
    %9 = vector.extract_strided_slice %5 {offsets = [0, 0], sizes = [8, 1], strides = [1, 1]} : vector<32x1xf32> to vector<8x1xf32>
    %10 = vector.extract_strided_slice %5 {offsets = [8, 0], sizes = [8, 1], strides = [1, 1]} : vector<32x1xf32> to vector<8x1xf32>
    %11 = arith.addf %9, %10 : vector<8x1xf32>
    %12 = vector.extract_strided_slice %5 {offsets = [16, 0], sizes = [8, 1], strides = [1, 1]} : vector<32x1xf32> to vector<8x1xf32>
    %13 = arith.addf %11, %12 : vector<8x1xf32>
    %14 = vector.extract_strided_slice %5 {offsets = [24, 0], sizes = [8, 1], strides = [1, 1]} : vector<32x1xf32> to vector<8x1xf32>
    %15 = arith.addf %13, %14 : vector<8x1xf32>
    %16 = vector.extract_strided_slice %8 {offsets = [0, 0], sizes = [8, 1], strides = [1, 1]} : vector<32x1xf32> to vector<8x1xf32>
    %17 = vector.extract_strided_slice %8 {offsets = [8, 0], sizes = [8, 1], strides = [1, 1]} : vector<32x1xf32> to vector<8x1xf32>
    %18 = arith.addf %16, %17 : vector<8x1xf32>
    %19 = vector.extract_strided_slice %8 {offsets = [16, 0], sizes = [8, 1], strides = [1, 1]} : vector<32x1xf32> to vector<8x1xf32>
    %20 = arith.addf %18, %19 : vector<8x1xf32>
    %21 = vector.extract_strided_slice %8 {offsets = [24, 0], sizes = [8, 1], strides = [1, 1]} : vector<32x1xf32> to vector<8x1xf32>
    %22 = arith.addf %20, %21 : vector<8x1xf32>
    %cst_6 = arith.constant 9.765625E-4 : f32
    %23 = vector.broadcast %cst_6 : f32 to vector<8x1xf32>
    %24 = arith.mulf %15, %23 : vector<8x1xf32>
    %cst_7 = arith.constant 9.765625E-4 : f32
    %25 = vector.broadcast %cst_7 : f32 to vector<8x1xf32>
    %26 = arith.mulf %22, %25 : vector<8x1xf32>
    %27 = arith.mulf %24, %24 : vector<8x1xf32>
    %28 = arith.subf %26, %27 : vector<8x1xf32>
    %cst_8 = arith.constant 0.000000e+00 : f32
    %29 = vector.broadcast %cst_8 : f32 to vector<8x1xf32>
    %30 = arith.maximumf %28, %29 : vector<8x1xf32>
    %cst_9 = arith.constant 9.99999974E-6 : f32
    %31 = vector.broadcast %cst_9 : f32 to vector<8x1xf32>
    %32 = arith.addf %30, %31 : vector<8x1xf32>
    %33 = math.rsqrt %32 : vector<8x1xf32>
    %34 = tpu.concatenate %24, %24, %24, %24 in 0 : vector<8x1xf32>, vector<8x1xf32>, vector<8x1xf32>, vector<8x1xf32> -> vector<32x1xf32>
    %35 = tpu.concatenate %33, %33, %33, %33 in 0 : vector<8x1xf32>, vector<8x1xf32>, vector<8x1xf32>, vector<8x1xf32> -> vector<32x1xf32>
    %36 = vector.broadcast %34 : vector<32x1xf32> to vector<32x256xf32>
    %37 = arith.subf %3, %36 : vector<32x256xf32>
    %38 = vector.broadcast %35 : vector<32x1xf32> to vector<32x256xf32>
    %39 = arith.mulf %37, %38 : vector<32x256xf32>
    %cst_10 = arith.constant 0.000000e+00 : f32
    %40 = vector.broadcast %cst_10 : f32 to vector<32x256xf32>
    %41 = arith.cmpf oge, %39, %40 : vector<32x256xf32>
    %cst_11 = arith.constant 2.000000e-01 : f32
    %42 = vector.broadcast %cst_11 : f32 to vector<32x256xf32>
    %43 = arith.mulf %42, %39 : vector<32x256xf32>
    %44 = arith.select %41, %39, %43 : vector<32x256xi1>, vector<32x256xf32>
    %c0_12 = arith.constant 0 : index
    %c0_13 = arith.constant 0 : index
    %c0_14 = arith.constant 0 : index
    %45 = vector.load %arg3[%c0_12, %c0_13, %c0_14] : memref<1x32x256xf32, #tpu.memory_space<vmem>>, vector<1x32x256xf32>
    %46 = vector.shape_cast %45 : vector<1x32x256xf32> to vector<32x256xf32>
    %47 = vector.shape_cast %44 : vector<32x256xf32> to vector<1x32x256xf32>
    tpu.vector_store %arg3[%c0_12, %c0_13, %c0_14], %47 {strides = array<i32>} : memref<1x32x256xf32, #tpu.memory_space<vmem>>, vector<1x32x256xf32>,
    return
  }
  func.func @transform_0(%arg0: i32) -> (i32, i32, i32) {
    %c0_i32 = arith.constant 0 : i32
    %c0_i32_0 = arith.constant 0 : i32
    %c0_i32_1 = arith.constant 0 : i32
    return %arg0, %c0_i32, %c0_i32_0 : i32, i32, i32
  }
  func.func @transform_1(%arg0: i32) -> (i32, i32) {
    %c0_i32 = arith.constant 0 : i32
    %c0_i32_0 = arith.constant 0 : i32
    %c0_i32_1 = arith.constant 0 : i32
    return %c0_i32, %c0_i32_0 : i32, i32
  }
  func.func @transform_2(%arg0: i32) -> (i32, i32, i32) {
    %c0_i32 = arith.constant 0 : i32
    %c0_i32_0 = arith.constant 0 : i32
    %c0_i32_1 = arith.constant 0 : i32
    return %arg0, %c0_i32, %c0_i32_0 : i32, i32, i32
  }
}

</mosaic_0001>

<llo_original>
// kernel: tpu_custom_call.1
$region0: #{tpu_custom_call.1}
  #allocation0 [shape = 'u32[]', space=smem, size = 0x4, offset = 0x4, fixed_abs, tag = 'smem constant byte address 0x4 - core index']
  #allocation1 [shape = 'u32[72,128]{1,0:T(1,128)}', space=vmem, size = 0x9000, scoped, tag = 'internal scratch']
  %s0 = inlined_call_operand.vmem [shape: f32[2,4,256], index: 0, kind: input, shape index: {}]
  %s1 = inlined_call_operand.vmem [shape: f32[32,4], index: 1, kind: input, shape index: {}]
  %s2 = inlined_call_operand.hbm [shape: f32[2,32,256], index: 2, kind: output, shape index: {}]
  %s3 = sld [smem:[#allocation0]]
  $region41: #{tpu_custom_call.1} parent=0
    _
  %s5 = ssub.s32 1, %s3
  %s6 = scalar_select 0, %s5, %s3
  $region1: #{tpu_custom_call.1} parent=0
    #allocation2 [shape = 'u8[65536]{0}', space=vmem, size = 0x10000, scoped, tag = 'output window, operand 0']
    #allocation3 [shape = 's32[2]{0}', space=sflag, size = 0x8, scoped, tag = 'scoped memory for tpu_custom_call.1']
    %7 = vsyncpa [#allocation3], 0
    %s8 = scalar_lea.sflag [#allocation3], 1
    %9 = vsyncpa %s8, 0
    loop: start=0, step=1, limit=4
    $region2: #{tpu_custom_call.1} parent=1 // loop_pre_header
      _
    $region3: #{tpu_custom_call.1} parent=1 // loop_header
      %s11 = sphi 0, %s15
      %p12 = scmp.ge.s32.totalorder %s11, 4
      %s21 = sphi 0, %s23
      %s24 = sphi 0, %s21
      %s25 = sphi 0, %s24
      %s41 = sphi 0, %s25
      %s45 = sphi 0, %s45
      %s47 = sphi 0, %s45
      %s48 = sphi 0, %s47
      %s62 = sphi 0, %s48
      %s68 = sphi 0, %s70
      %s71 = sphi 0, %s68
      %s72 = sphi 0, %s71
      %s88 = sphi 0, %s72
    $region4: #{tpu_custom_call.1} parent=1 // loop_header_branch
      %14 = sbr.rel (%p12) target = $region8
    $region5: #{tpu_custom_call.1} parent=1 // loop_body
      %s16 = ssub.s32 %s11, 1
      %s17 = ssub.s32 %s11, 2
      %s18 = sadd.s32 %s11, 1
      %s19 = ssub.s32 %s11, %s18
      %p20 = scmp.eq.s32.totalorder %s19, 0
      %s22 = sadd.s32 %s21, 1
      %s23 = scalar_select %p20, %s21, %s22
      %p26 = pneg %p20
      %p27 = scmp.eq.s32.totalorder %s11, 1
      %p28 = por %p26, %p27
      %p29 = scmp.ne.s32.totalorder %s21, %s24
      %p30 = scmp.eq.s32.totalorder %s11, 0
      %p31 = por %p29, %p30
      %p32 = scmp.ne.s32.totalorder %s21, %s24
      %p33 = scmp.eq.s32.totalorder %s16, 1
      %p34 = por %p32, %p33
      %p35 = scmp.ne.s32.totalorder %s24, %s25
      %p36 = scmp.eq.s32.totalorder %s16, 0
      %p37 = por %p35, %p36
      %p38 = scmp.ne.s32.totalorder %s24, %s25
      %p39 = scmp.eq.s32.totalorder %s17, 1
      %p40 = por %p38, %p39
      %p42 = scmp.ne.s32.totalorder %s25, %s41
      %p43 = scmp.eq.s32.totalorder %s17, 0
      %p44 = por %p42, %p43
      %s46 = sadd.s32 %s45, 1
      %p49 = scmp.eq.s32.totalorder %s11, 1
      %p50 = scmp.ne.s32.totalorder %s45, %s47
      %p51 = scmp.eq.s32.totalorder %s11, 0
      %p52 = por %p50, %p51
      %p53 = scmp.ne.s32.totalorder %s45, %s47
      %p54 = scmp.eq.s32.totalorder %s16, 1
      %p55 = por %p53, %p54
      %p56 = scmp.ne.s32.totalorder %s47, %s48
      %p57 = scmp.eq.s32.totalorder %s16, 0
      %p58 = por %p56, %p57
      %p59 = scmp.ne.s32.totalorder %s47, %s48
      %p60 = scmp.eq.s32.totalorder %s17, 1
      %p61 = por %p59, %p60
      %p63 = scmp.ne.s32.totalorder %s48, %s62
      %p64 = scmp.eq.s32.totalorder %s17, 0
      %p65 = por %p63, %p64
      %s66 = ssub.s32 %s11, %s18
      %p67 = scmp.eq.s32.totalorder %s66, 0
      %s69 = sadd.s32 %s68, 1
      %s70 = scalar_select %p67, %s68, %s69
      %p73 = pneg %p67
      %p74 = scmp.eq.s32.totalorder %s11, 1
      %p75 = por %p73, %p74
      %p76 = scmp.ne.s32.totalorder %s68, %s71
      %p77 = scmp.eq.s32.totalorder %s11, 0
      %p78 = por %p76, %p77
      %p79 = scmp.ne.s32.totalorder %s68, %s71
      %p80 = scmp.eq.s32.totalorder %s16, 1
      %p81 = por %p79, %p80
      %p82 = scmp.ne.s32.totalorder %s71, %s72
      %p83 = scmp.eq.s32.totalorder %s16, 0
      %p84 = por %p82, %p83
      %p85 = scmp.ne.s32.totalorder %s71, %s72
      %p86 = scmp.eq.s32.totalorder %s17, 1
      %p87 = por %p85, %p86
      %p89 = scmp.ne.s32.totalorder %s72, %s88
      %p90 = scmp.eq.s32.totalorder %s17, 0
      %p91 = por %p89, %p90
      %p92 = scmp.le.s32.totalorder 1, %s11
      %p93 = scmp.lt.s32.totalorder %s11, 3
      %p94 = pnand %p92, %p93
      %p95 = pneg %p94
      // Predicated region
      $region9: #{tpu_custom_call.1} parent=5 // pred_check
        _
      $region10: #{tpu_custom_call.1} parent=5 // pred_check_branch
        %97 = sbr.rel (%p94) target = $region12
      $region11: #{tpu_custom_call.1} parent=5 // pred_region
        %s98 = ssub.s32 %s11, 1
        // Predicated region
        $region13: #{tpu_custom_call.1} parent=11 // pred_check
          %p99 = pneg %p58
        $region14: #{tpu_custom_call.1} parent=11 // pred_check_branch
          %101 = sbr.rel (%p99) target = $region16
        $region15: #{tpu_custom_call.1} parent=11 // pred_region
          _
        $region16: #{tpu_custom_call.1} parent=11 // pred_fallthru
          _
      $region12: #{tpu_custom_call.1} parent=5 // pred_fallthru
        _
      %p102 = scmp.lt.s32.totalorder %s11, 2
      // Predicated region
      $region17: #{tpu_custom_call.1} parent=5 // pred_check
        %p103 = pneg %p102
      $region18: #{tpu_custom_call.1} parent=5 // pred_check_branch
        %105 = sbr.rel (%p103) target = $region20
      $region19: #{tpu_custom_call.1} parent=5 // pred_region
        // Predicated region
        $region21: #{tpu_custom_call.1} parent=19 // pred_check
          %p106 = pneg %p31
        $region22: #{tpu_custom_call.1} parent=19 // pred_check_branch
          %108 = sbr.rel (%p106) target = $region24
        $region23: #{tpu_custom_call.1} parent=19 // pred_region
          %p109 = scmp.lt.s32.totalorder %s11, 1
          %s110 = scalar_select %p109, %s11, 1
          %s111 = smul.addr %s110, 2
          %s112 = smul.addr %s111, 4
          %s113 = scalar_lea.vmem %s0, %s112
        $region24: #{tpu_custom_call.1} parent=19 // pred_fallthru
          _
      $region20: #{tpu_custom_call.1} parent=5 // pred_fallthru
        _
      %p114 = scmp.le.s32.totalorder 1, %s11
      %p115 = scmp.lt.s32.totalorder %s11, 3
      %p116 = pnand %p114, %p115
      %p117 = pneg %p116
      // Predicated region
      $region25: #{tpu_custom_call.1} parent=5 // pred_check
        _
      $region26: #{tpu_custom_call.1} parent=5 // pred_check_branch
        %119 = sbr.rel (%p116) target = $region28
      $region27: #{tpu_custom_call.1} parent=5 // pred_region
        %s120 = ssub.s32 %s11, 1
        %p121 = scmp.lt.s32.totalorder %s16, 1
        %s122 = scalar_select %p121, %s16, 1
        %s123 = smul.addr %s122, 2
        %s124 = smul.addr %s123, 4
        %s125 = scalar_lea.vmem %s0, %s124
        %p126 = pneg %p37
        %p127 = pneg %p34
        %p128 = pneg %p58
        %p129 = pneg %p55
        %p130 = pneg %p84
        %p131 = pneg %p81
        %s132 = sand.u32 %s71, 1
        %s133 = scalar_lea.sflag [#allocation3], %s132
        %s134 = sand.u32 %s71, 1
        %s135 = smul.addr %s134, 64
        %s136 = scalar_lea.vmem [#allocation2], %s135
        %p137 = scmp.lt.s32.totalorder %s16, 1
        %s138 = scalar_select %p137, %s16, 1
        %s139 = smul.addr %s138, 2
        %s140 = smul.addr %s139, 4
        %s141 = scalar_lea.vmem %s0, %s140
        %v142 = vld [vmem:[%s1] sm:$0xff]
        %v143 = vld [vmem:[%s1 + $0x8] sm:$0xff]
        %v144 = vld [vmem:[%s1 + $0x10] sm:$0xff]
        %v145 = vld [vmem:[%s1 + $0x18] sm:$0xff]
        %v146 = vld [vmem:[%s141] sm:$0xff]
        %148 = vst [vmem:[#allocation1] ss:$2 sm:$0xff] %v146
        %v149 = vld.sshfl [vmem:[#allocation1] sm:$0xff pattern:$0x75316420]
        %v150 = vld.sshfl [vmem:[#allocation1 + $0x8] sm:$0xff pattern:$0x75316420]
        %vm151 = vcmask 31744
        %v153 = vsel %vm151, %v142, 0
        %v156 = vsel %vm151, %v143, 0
        %v159 = vsel %vm151, %v144, 0
        %v162 = vsel %vm151, %v145, 0
        %vm164 = vcmask 1043456
        %v165 = vsel %vm164, %v149, 0
        %v167 = vsel %vm164, %v150, 0
        %169 = vmatpush.msra.mxu0 0.0
        %170 = vmatpush.msra.mxu0 0.0
        %171 = vmatpush.msra.mxu0 0.0
        %172 = vmatpush.msra.mxu0 0.0
        %173 = vmatpush.msra.mxu0 0.0
        %174 = vmatpush.msra.mxu0 0.0
        %175 = vmatpush.msra.mxu0 0.0
        %176 = vmatpush.msra.mxu0 0.0
        %177 = vmatpush.msra.mxu0 0.0
        %178 = vmatpush.msra.mxu0 0.0
        %179 = vmatpush.msra.mxu0 0.0
        %180 = vmatpush.msra.mxu0 0.0
        %181 = vmatpush.msra.mxu0 0.0
        %182 = vmatpush.msra.mxu0 0.0
        %183 = vmatpush.msra.mxu0 0.0
        %184 = vmatpush.msra.mxu0 %v165
        %185 = vmatmul.f32.gmra.mxu0 %v153
        %v186 = vpop.f32.mrf.mxu0
        %v187 = vadd.f32 0.0, %v186
        %188 = vmatmul.f32.gmra.mxu0 %v156
        %v189 = vpop.f32.mrf.mxu0
        %v190 = vadd.f32 0.0, %v189
        %191 = vmatmul.f32.gmra.mxu0 %v159
        %v192 = vpop.f32.mrf.mxu0
        %v193 = vadd.f32 0.0, %v192
        %194 = vmatmul.f32.gmra.mxu0 %v162
        %v195 = vpop.f32.mrf.mxu0
        %v196 = vadd.f32 0.0, %v195
        %197 = vdwg.mxu0
        %198 = vmatpush.msra.mxu0 0.0
        %199 = vmatpush.msra.mxu0 0.0
        %200 = vmatpush.msra.mxu0 0.0
        %201 = vmatpush.msra.mxu0 0.0
        %202 = vmatpush.msra.mxu0 0.0
        %203 = vmatpush.msra.mxu0 0.0
        %204 = vmatpush.msra.mxu0 0.0
        %205 = vmatpush.msra.mxu0 0.0
        %206 = vmatpush.msra.mxu0 0.0
        %207 = vmatpush.msra.mxu0 0.0
        %208 = vmatpush.msra.mxu0 0.0
        %209 = vmatpush.msra.mxu0 0.0
        %210 = vmatpush.msra.mxu0 0.0
        %211 = vmatpush.msra.mxu0 0.0
        %212 = vmatpush.msra.mxu0 0.0
        %213 = vmatpush.msra.mxu0 %v167
        %214 = vmatmul.f32.gmra.mxu0 %v153
        %v215 = vpop.f32.mrf.mxu0
        %v216 = vadd.f32 0.0, %v215
        %217 = vmatmul.f32.gmra.mxu0 %v156
        %v218 = vpop.f32.mrf.mxu0
        %v219 = vadd.f32 0.0, %v218
        %220 = vmatmul.f32.gmra.mxu0 %v159
        %v221 = vpop.f32.mrf.mxu0
        %v222 = vadd.f32 0.0, %v221
        %223 = vmatmul.f32.gmra.mxu0 %v162
        %v224 = vpop.f32.mrf.mxu0
        %v225 = vadd.f32 0.0, %v224
        %226 = vdwg.mxu0
        %v227 = vadd.f32 %v187, %v216
        %228 = vadd.xlane.f32.xlu0 %v227
        %v229 = vpop.xlane.xlu0 %228
        %v230 = vadd.f32 %v190, %v219
        %231 = vadd.xlane.f32.xlu0 %v230
        %v232 = vpop.xlane.xlu0 %231
        %v233 = vadd.f32 %v193, %v222
        %234 = vadd.xlane.f32.xlu0 %v233
        %v235 = vpop.xlane.xlu0 %234
        %v236 = vadd.f32 %v196, %v225
        %237 = vadd.xlane.f32.xlu0 %v236
        %v238 = vpop.xlane.xlu0 %237
        %v239 = vmul.f32 %v187, %v187
        %v240 = vmul.f32 %v216, %v216
        %v241 = vmul.f32 %v190, %v190
        %v242 = vmul.f32 %v219, %v219
        %v243 = vmul.f32 %v193, %v193
        %v244 = vmul.f32 %v222, %v222
        %v245 = vmul.f32 %v196, %v196
        %v246 = vmul.f32 %v225, %v225
        %v247 = vadd.f32 %v239, %v240
        %248 = vadd.xlane.f32.xlu0 %v247
        %v249 = vpop.xlane.xlu0 %248
        %v250 = vadd.f32 %v241, %v242
        %251 = vadd.xlane.f32.xlu0 %v250
        %v252 = vpop.xlane.xlu0 %251
        %v253 = vadd.f32 %v243, %v244
        %254 = vadd.xlane.f32.xlu0 %v253
        %v255 = vpop.xlane.xlu0 %254
        %v256 = vadd.f32 %v245, %v246
        %257 = vadd.xlane.f32.xlu0 %v256
        %v258 = vpop.xlane.xlu0 %257
        %v259 = vadd.f32 %v229, %v232
        %v260 = vadd.f32 %v259, %v235
        %v261 = vadd.f32 %v260, %v238
        %v262 = vadd.f32 %v249, %v252
        %v263 = vadd.f32 %v262, %v255
        %v264 = vadd.f32 %v263, %v258
        %v265 = vmul.f32 %v261, 0.0009765625
        %v266 = vmul.f32 %v264, 0.0009765625
        %v267 = vmul.f32 %v265, %v265
        %v268 = vsub.f32 %v266, %v267
        %v269 = vmax.f32 %v268, 0.0
        %v270 = vadd.f32 %v269, 1e-05
        %v271 = vrsqrt.pop %v270
        %v272 = vmul.f32 %v271, %v270
        %v273 = vmul.f32 %v272, %v271
        %v274 = vmul.f32 0.5, %v273
        %v275 = vsub.f32 1.5, %v274
        %v276 = vmul.f32 %v271, %v275
        %vm277 = vweird.f32 %v270
        %vm278 = vweird.f32 %v271
        %vm279 = vmor %vm277, %vm278
        %v280 = vsel %vm279, %v271, %v276
        %282 = vset.pattern.permute.xlu0 0
        %283 = vperm.xlu0 %282, %v265
        %v284 = vpop.permute.xlu0 %283
        %v286 = vsub.f32 %v187, %v284
        %v287 = vsub.f32 %v216, %v284
        %v288 = vsub.f32 %v190, %v284
        %v289 = vsub.f32 %v219, %v284
        %v290 = vsub.f32 %v193, %v284
        %v291 = vsub.f32 %v222, %v284
        %v292 = vsub.f32 %v196, %v284
        %v293 = vsub.f32 %v225, %v284
        %295 = vset.pattern.permute.xlu0 0
        %296 = vperm.xlu0 %295, %v280
        %v297 = vpop.permute.xlu0 %296
        %v299 = vmul.f32 %v286, %v297
        %v300 = vmul.f32 %v287, %v297
        %v301 = vmul.f32 %v288, %v297
        %v302 = vmul.f32 %v289, %v297
        %v303 = vmul.f32 %v290, %v297
        %v304 = vmul.f32 %v291, %v297
        %v305 = vmul.f32 %v292, %v297
        %v306 = vmul.f32 %v293, %v297
        %vm307 = vcmp.ge.f32.partialorder %v299, 0.0
        %vm308 = vcmp.ge.f32.partialorder %v300, 0.0
        %vm309 = vcmp.ge.f32.partialorder %v301, 0.0
        %vm310 = vcmp.ge.f32.partialorder %v302, 0.0
        %vm311 = vcmp.ge.f32.partialorder %v303, 0.0
        %vm312 = vcmp.ge.f32.partialorder %v304, 0.0
        %vm313 = vcmp.ge.f32.partialorder %v305, 0.0
        %vm314 = vcmp.ge.f32.partialorder %v306, 0.0
        %v315 = vmul.f32 %v299, 0.2
        %v316 = vmul.f32 %v300, 0.2
        %v317 = vmul.f32 %v301, 0.2
        %v318 = vmul.f32 %v302, 0.2
        %v319 = vmul.f32 %v303, 0.2
        %v320 = vmul.f32 %v304, 0.2
        %v321 = vmul.f32 %v305, 0.2
        %v322 = vmul.f32 %v306, 0.2
        %v323 = vsel %vm307, %v299, %v315
        %v324 = vsel %vm308, %v300, %v316
        %v325 = vsel %vm309, %v301, %v317
        %v326 = vsel %vm310, %v302, %v318
        %v327 = vsel %vm311, %v303, %v319
        %v328 = vsel %vm312, %v304, %v320
        %v329 = vsel %vm313, %v305, %v321
        %v330 = vsel %vm314, %v306, %v322
        %331 = vst [vmem:[%s136] sm:$0xff] %v323
        %332 = vst [vmem:[%s136 + $0x8] sm:$0xff] %v324
        %333 = vst [vmem:[%s136 + $0x10] sm:$0xff] %v325
        %334 = vst [vmem:[%s136 + $0x18] sm:$0xff] %v326
        %335 = vst [vmem:[%s136 + $0x20] sm:$0xff] %v327
        %336 = vst [vmem:[%s136 + $0x28] sm:$0xff] %v328
        %337 = vst [vmem:[%s136 + $0x30] sm:$0xff] %v329
        %338 = vst [vmem:[%s136 + $0x38] sm:$0xff] %v330
        %s339 = sand.u32 %s71, 1
        %s340 = scalar_lea.sflag [#allocation3], %s339
        %s341 = sand.u32 %s71, 1
        %s342 = smul.addr %s341, 64
        %s343 = scalar_lea.vmem [#allocation2], %s342
        // Predicated region
        $region29: #{tpu_custom_call.1} parent=27 // pred_check
          %p344 = pneg %p81
        $region30: #{tpu_custom_call.1} parent=27 // pred_check_branch
          %346 = sbr.rel (%p344) target = $region32
        $region31: #{tpu_custom_call.1} parent=27 // pred_region
          %348 = vsyncadd %s340, 0
          %s349 = smul.addr %s16, 8
          %s350 = smul.addr %s349, 8
          %s351 = scalar_lea.hbm %s2, %s350
          %s352 = sshll.u32 %s343, 4
          %s353 = int_to_ptr.vmem [resolvable:$true] %s352
          %s354 = sshll.u32 %s351, 4
          %s355 = int_to_ptr.hbm [resolvable:$true] %s354
          %360 = dma.vmem_to_hbm [thread:$0]  %s353, 1024, %s355, %s340, 256, 256, 16
        $region32: #{tpu_custom_call.1} parent=27 // pred_fallthru
          _
      $region28: #{tpu_custom_call.1} parent=5 // pred_fallthru
        _
      %p361 = scmp.le.s32.totalorder 2, %s11
      // Predicated region
      $region33: #{tpu_custom_call.1} parent=5 // pred_check
        %p362 = pneg %p361
      $region34: #{tpu_custom_call.1} parent=5 // pred_check_branch
        %364 = sbr.rel (%p362) target = $region36
      $region35: #{tpu_custom_call.1} parent=5 // pred_region
        %s365 = ssub.s32 %s11, 2
        // Predicated region
        $region37: #{tpu_custom_call.1} parent=35 // pred_check
          %p366 = pneg %p87
        $region38: #{tpu_custom_call.1} parent=35 // pred_check_branch
          %368 = sbr.rel (%p366) target = $region40
        $region39: #{tpu_custom_call.1} parent=35 // pred_region
          %s369 = sand.u32 %s72, 1
          %s370 = scalar_lea.sflag [#allocation3], %s369
          %s371 = sand.u32 %s72, 1
          %s372 = smul.addr %s371, 64
          %s373 = scalar_lea.vmem [#allocation2], %s372
          %375 = dma.done %s370, 1024
        $region40: #{tpu_custom_call.1} parent=35 // pred_fallthru
          _
      $region36: #{tpu_custom_call.1} parent=5 // pred_fallthru
        _
    $region6: #{tpu_custom_call.1} parent=1 // loop_footer
      %s15 = sadd.s32 1, %s11
    $region7: #{tpu_custom_call.1} parent=1 // loop_footer_branch
      %10 = sbr.rel target = $region3
    $region8: #{tpu_custom_call.1} parent=1 // loop_exit
      _
    %376 = vsyncpa [#allocation3], 1
    %s377 = scalar_lea.sflag [#allocation3], 1
    %378 = vsyncpa %s377, 1

</llo_original>
